<compile_context>
chip_gen: v7x
topology: tpu7x:2x2x1
jax: 0.10.0
libtpu: 0.0.40
codegen_flags: <defaults>
</compile_context>

<pallas_src>
import jax
import jax.numpy as jnp
from jax.experimental import pallas as pl
from jax.experimental.pallas import tpu as pltpu


# ---------------------------------------------------------------------------
# Fused SCSE kernel: one batch element per grid step.
# ---------------------------------------------------------------------------
def _scse_kernel(x_ref, w1_ref, w2_ref, wsse_ref, bsse_ref, out_ref):
    # x_ref:    (HW, C)   one batch element, channels-last
    # w1_ref:   (C, Cr)   cSE squeeze 1x1 conv weight (no bias)
    # w2_ref:   (Cr, C)   cSE excite 1x1 conv weight (no bias)
    # wsse_ref: (C, 1)    sSE 1x1 conv weight
    # bsse_ref: (1, 1)    sSE 1x1 conv bias
    # out_ref:  (HW, C)
    x = x_ref[...]

    # --- channel squeeze-and-excitation (cSE) ---
    gap = jnp.mean(x, axis=0, keepdims=True)                          # (1, C)
    h = jnp.dot(gap, w1_ref[...], preferred_element_type=jnp.float32)
    h = jnp.maximum(h, 0.0)                                           # relu
    catt = jax.nn.sigmoid(
        jnp.dot(h, w2_ref[...], preferred_element_type=jnp.float32))  # (1, C)

    # --- spatial squeeze-and-excitation (sSE) ---
    satt = jax.nn.sigmoid(
        jnp.dot(x, wsse_ref[...], preferred_element_type=jnp.float32)
        + bsse_ref[...])                                              # (HW, 1)

    # out = x*catt + x*satt = x * (catt + satt)
    out_ref[...] = (x * (catt + satt)).astype(out_ref.dtype)


# ---------------------------------------------------------------------------
# Wrapper: NCHW in, NCHW out (PyTorch convention); layout glue outside kernel.
# ---------------------------------------------------------------------------
def scse_block(x_nchw, params):
    B, C, H, W = x_nchw.shape
    HW = H * W
    Cr = params["w1"].shape[1]

    # NCHW -> (B, H*W, C): channels on the TPU lane axis.
    x = jnp.transpose(x_nchw, (0, 2, 3, 1)).reshape(B, HW, C)

    out = pl.pallas_call(
        _scse_kernel,
        out_shape=jax.ShapeDtypeStruct((B, HW, C), x.dtype),
        grid=(B,),
        in_specs=[
            pl.BlockSpec((None, HW, C), lambda b: (b, 0, 0)),
            pl.BlockSpec((C, Cr), lambda b: (0, 0)),
            pl.BlockSpec((Cr, C), lambda b: (0, 0)),
            pl.BlockSpec((C, 1), lambda b: (0, 0)),
            pl.BlockSpec((1, 1), lambda b: (0, 0)),
        ],
        out_specs=pl.BlockSpec((None, HW, C), lambda b: (b, 0, 0)),
        compiler_params=pltpu.CompilerParams(
            dimension_semantics=("parallel",)),
    )(x, params["w1"], params["w2"], params["w_sse"], params["b_sse"])

    return jnp.transpose(out.reshape(B, H, W, C), (0, 3, 1, 2))


# ---------------------------------------------------------------------------
# Deterministic synthetic parameters
# ---------------------------------------------------------------------------
def make_params(key, C, ratio=2):
    Cr = max(C // ratio, 1)
    k1, k2, k3, k4 = jax.random.split(key, 4)
    return {
        "w1": 0.3 * jax.random.normal(k1, (C, Cr), jnp.float32),
        "w2": 0.3 * jax.random.normal(k2, (Cr, C), jnp.float32),
        "w_sse": 0.3 * jax.random.normal(k3, (C, 1), jnp.float32),
        "b_sse": 0.1 * jax.random.normal(k4, (1, 1), jnp.float32),
    }


# ---------------------------------------------------------------------------
# Pure-JAX reference
# ---------------------------------------------------------------------------
def reference(x_nchw, params):
    gap = jnp.mean(x_nchw, axis=(2, 3))                               # (B, C)
    h = jnp.maximum(gap @ params["w1"], 0.0)
    catt = jax.nn.sigmoid(h @ params["w2"])                           # (B, C)
    cse = x_nchw * catt[:, :, None, None]
    sse = jax.nn.sigmoid(
        jnp.einsum("bchw,co->bohw", x_nchw, params["w_sse"])
        + params["b_sse"][0, 0])                                      # (B,1,H,W)
    return cse + x_nchw * sse


if __name__ == "__main__":
    B, C, H, W = 2, 8, 16, 16
    ratio = 2

    key = jax.random.PRNGKey(0)
    kx, kp = jax.random.split(key)
    x = jax.random.normal(kx, (B, C, H, W), jnp.float32)
    params = make_params(kp, C, ratio)

    fwd = jax.jit(scse_block)
    out = jax.block_until_ready(fwd(x, params))
    ref = reference(x, params)

    assert out.shape == (B, C, H, W), out.shape
    max_err = float(jnp.max(jnp.abs(out - ref)))
    if max_err < 1e-4:
        print("KERNEL_OK")
    else:
        print(f"MISMATCH max_err={max_err}")
</pallas_src>

<mosaic_0001>
module attributes {stable_mosaic.version = 11 : i64} {
  func.func @_scse_kernel(%arg0: i32, %arg1: memref<1x256x8xf32, #tpu.memory_space<vmem>>, %arg2: memref<8x4xf32, #tpu.memory_space<vmem>>, %arg3: memref<4x8xf32, #tpu.memory_space<vmem>>, %arg4: memref<8x1xf32, #tpu.memory_space<vmem>>, %arg5: memref<1x1xf32, #tpu.memory_space<vmem>>, %arg6: memref<1x256x8xf32, #tpu.memory_space<vmem>>) attributes {dimension_semantics = [#tpu.dimension_semantics<parallel>], iteration_bounds = array<i64: 2>, scalar_prefetch = 0 : i64, scratch_operands = 0 : i64, tpu.core_type = #tpu.core_type<tc>, window_params = [{transform_indices = @transform_0, window_bounds = array<i64: 1, 256, 8>}, {pipeline_mode = #tpu.pipeline_mode<synchronous>, transform_indices = @transform_1, window_bounds = array<i64: 8, 4>}, {pipeline_mode = #tpu.pipeline_mode<synchronous>, transform_indices = @transform_2, window_bounds = array<i64: 4, 8>}, {pipeline_mode = #tpu.pipeline_mode<synchronous>, transform_indices = @transform_3, window_bounds = array<i64: 8, 1>}, {pipeline_mode = #tpu.pipeline_mode<synchronous>, transform_indices = @transform_4, window_bounds = array<i64: 1, 1>}, {transform_indices = @transform_5, window_bounds = array<i64: 1, 256, 8>}]} {
    %c0 = arith.constant 0 : index
    %c0_0 = arith.constant 0 : index
    %c0_1 = arith.constant 0 : index
    %0 = vector.load %arg1[%c0, %c0_0, %c0_1] : memref<1x256x8xf32, #tpu.memory_space<vmem>>, vector<1x256x8xf32>
    %1 = vector.shape_cast %0 : vector<1x256x8xf32> to vector<256x8xf32>
    %cst = arith.constant dense<0.000000e+00> : vector<8xf32>
    %2 = vector.multi_reduction <add>, %1, %cst [0] : vector<256x8xf32> to vector<8xf32>
    %3 = vector.shape_cast %2 : vector<8xf32> to vector<1x8xf32>
    %cst_2 = arith.constant 2.560000e+02 : f32
    %4 = vector.broadcast %cst_2 : f32 to vector<1x8xf32>
    %5 = arith.divf %3, %4 : vector<1x8xf32>
    %c0_3 = arith.constant 0 : index
    %c0_4 = arith.constant 0 : index
    %6 = vector.load %arg2[%c0_3, %c0_4] : memref<8x4xf32, #tpu.memory_space<vmem>>, vector<8x4xf32>
    %cst_5 = arith.constant dense<0.000000e+00> : vector<1x4xf32>
    %7 = tpu.matmul %5, %6, %cst_5 {dimension_numbers = #tpu.dot_dimension_numbers<[1], [0], [0], [1], [0, 0, 1, 1], [], []>} : vector<1x8xf32>, vector<8x4xf32>, vector<1x4xf32> -> vector<1x4xf32>
    %cst_6 = arith.constant 0.000000e+00 : f32
    %8 = vector.broadcast %cst_6 : f32 to vector<1x4xf32>
    %9 = arith.maximumf %7, %8 : vector<1x4xf32>
    %c0_7 = arith.constant 0 : index
    %c0_8 = arith.constant 0 : index
    %10 = vector.load %arg3[%c0_7, %c0_8] : memref<4x8xf32, #tpu.memory_space<vmem>>, vector<4x8xf32>
    %cst_9 = arith.constant dense<0.000000e+00> : vector<1x8xf32>
    %11 = tpu.matmul %9, %10, %cst_9 {dimension_numbers = #tpu.dot_dimension_numbers<[1], [0], [0], [1], [0, 0, 1, 1], [], []>} : vector<1x4xf32>, vector<4x8xf32>, vector<1x8xf32> -> vector<1x8xf32>
    %12 = arith.negf %11 : vector<1x8xf32>
    %13 = math.exp %12 : vector<1x8xf32>
    %cst_10 = arith.constant 1.000000e+00 : f32
    %14 = vector.broadcast %cst_10 : f32 to vector<1x8xf32>
    %15 = arith.addf %14, %13 : vector<1x8xf32>
    %16 = arith.divf %14, %15 : vector<1x8xf32>
    %c0_11 = arith.constant 0 : index
    %c0_12 = arith.constant 0 : index
    %17 = vector.load %arg4[%c0_11, %c0_12] : memref<8x1xf32, #tpu.memory_space<vmem>>, vector<8x1xf32>
    %cst_13 = arith.constant dense<0.000000e+00> : vector<256x1xf32>
    %18 = tpu.matmul %1, %17, %cst_13 {dimension_numbers = #tpu.dot_dimension_numbers<[1], [0], [0], [1], [0, 0, 1, 1], [], []>} : vector<256x8xf32>, vector<8x1xf32>, vector<256x1xf32> -> vector<256x1xf32>
    %c0_14 = arith.constant 0 : index
    %c0_15 = arith.constant 0 : index
    %19 = vector.load %arg5[%c0_14, %c0_15] : memref<1x1xf32, #tpu.memory_space<vmem>>, vector<1x1xf32>
    %20 = vector.broadcast %19 : vector<1x1xf32> to vector<256x1xf32>
    %21 = arith.addf %18, %20 : vector<256x1xf32>
    %22 = arith.negf %21 : vector<256x1xf32>
    %23 = math.exp %22 : vector<256x1xf32>
    %cst_16 = arith.constant 1.000000e+00 : f32
    %24 = vector.broadcast %cst_16 : f32 to vector<256x1xf32>
    %25 = arith.addf %24, %23 : vector<256x1xf32>
    %26 = arith.divf %24, %25 : vector<256x1xf32>
    %27 = vector.broadcast %16 : vector<1x8xf32> to vector<256x8xf32>
    %28 = vector.broadcast %26 : vector<256x1xf32> to vector<256x8xf32>
    %29 = arith.addf %27, %28 : vector<256x8xf32>
    %30 = arith.mulf %1, %29 : vector<256x8xf32>
    %c0_17 = arith.constant 0 : index
    %c0_18 = arith.constant 0 : index
    %c0_19 = arith.constant 0 : index
    %31 = vector.load %arg6[%c0_17, %c0_18, %c0_19] : memref<1x256x8xf32, #tpu.memory_space<vmem>>, vector<1x256x8xf32>
    %32 = vector.shape_cast %31 : vector<1x256x8xf32> to vector<256x8xf32>
    %33 = vector.shape_cast %30 : vector<256x8xf32> to vector<1x256x8xf32>
    tpu.vector_store %arg6[%c0_17, %c0_18, %c0_19], %33 {strides = array<i32>} : memref<1x256x8xf32, #tpu.memory_space<vmem>>, vector<1x256x8xf32>,
    return
  }
  func.func @transform_0(%arg0: i32) -> (i32, i32, i32) {
    %c0_i32 = arith.constant 0 : i32
    %c0_i32_0 = arith.constant 0 : i32
    %c0_i32_1 = arith.constant 0 : i32
    return %arg0, %c0_i32, %c0_i32_0 : i32, i32, i32
  }
  func.func @transform_1(%arg0: i32) -> (i32, i32) {
    %c0_i32 = arith.constant 0 : i32
    %c0_i32_0 = arith.constant 0 : i32
    %c0_i32_1 = arith.constant 0 : i32
    return %c0_i32, %c0_i32_0 : i32, i32
  }
  func.func @transform_2(%arg0: i32) -> (i32, i32) {
    %c0_i32 = arith.constant 0 : i32
    %c0_i32_0 = arith.constant 0 : i32
    %c0_i32_1 = arith.constant 0 : i32
    return %c0_i32, %c0_i32_0 : i32, i32
  }
  func.func @transform_3(%arg0: i32) -> (i32, i32) {
    %c0_i32 = arith.constant 0 : i32
    %c0_i32_0 = arith.constant 0 : i32
    %c0_i32_1 = arith.constant 0 : i32
    return %c0_i32, %c0_i32_0 : i32, i32
  }
  func.func @transform_4(%arg0: i32) -> (i32, i32) {
    %c0_i32 = arith.constant 0 : i32
    %c0_i32_0 = arith.constant 0 : i32
    %c0_i32_1 = arith.constant 0 : i32
    return %c0_i32, %c0_i32_0 : i32, i32
  }
  func.func @transform_5(%arg0: i32) -> (i32, i32, i32) {
    %c0_i32 = arith.constant 0 : i32
    %c0_i32_0 = arith.constant 0 : i32
    %c0_i32_1 = arith.constant 0 : i32
    return %arg0, %c0_i32, %c0_i32_0 : i32, i32, i32
  }
}

</mosaic_0001>

<llo_original>
// kernel: scse_block.1
$region0: #{scse_block.1}
  #allocation0 [shape = 'u32[]', space=smem, size = 0x4, offset = 0x4, fixed_abs, tag = 'smem constant byte address 0x4 - core index']
  #allocation1 [shape = 'u32[144,128]{1,0:T(1,128)}', space=vmem, size = 0x12000, scoped, tag = 'internal scratch']
  #allocation2 [shape = 'f32[1,1]{1,0:T(1,128)S(1)}', space=vmem, size = 0x200, scoped, tag = 'scoped memory for scse_block.1']
  %s0 = inlined_call_operand.vmem [shape: f32[2,256,8], index: 0, kind: input, shape index: {}]
  %s1 = inlined_call_operand.vmem [shape: f32[8,4], index: 1, kind: input, shape index: {}]
  %s2 = inlined_call_operand.vmem [shape: f32[4,8], index: 2, kind: input, shape index: {}]
  %s3 = inlined_call_operand.vmem [shape: f32[8,1], index: 3, kind: input, shape index: {}]
  %s4 = inlined_call_operand.<no memory space> [shape: f32[1,1], index: 4, kind: input, shape index: {}]
  %s5 = inlined_call_operand.vmem [shape: f32[2,256,8], index: 5, kind: output, shape index: {}]
  %s6 = sld [smem:[#allocation0]]
  $region53: #{scse_block.1} parent=0
    _
  %s8 = ssub.s32 1, %s6
  %s9 = scalar_select 0, %s8, %s6
  %v10 = vstv %s4
  %11 = vst [vmem:[#allocation2] sm:$0x1] %v10
  loop: start=0, step=1, limit=4
  $region2: #{scse_block.1} parent=0 // loop_pre_header
    _
  $region3: #{scse_block.1} parent=0 // loop_header
    %s13 = sphi 0, %s17
    %p14 = scmp.ge.s32.totalorder %s13, 4
    %s23 = sphi 0, %s25
    %s26 = sphi 0, %s23
    %s27 = sphi 0, %s26
    %s43 = sphi 0, %s27
    %s47 = sphi 0, %s47
    %s49 = sphi 0, %s47
    %s50 = sphi 0, %s49
    %s64 = sphi 0, %s50
    %s68 = sphi 0, %s68
    %s70 = sphi 0, %s68
    %s71 = sphi 0, %s70
    %s85 = sphi 0, %s71
    %s89 = sphi 0, %s89
    %s91 = sphi 0, %s89
    %s92 = sphi 0, %s91
    %s106 = sphi 0, %s92
    %s110 = sphi 0, %s110
    %s112 = sphi 0, %s110
    %s113 = sphi 0, %s112
    %s127 = sphi 0, %s113
    %s133 = sphi 0, %s135
    %s136 = sphi 0, %s133
    %s137 = sphi 0, %s136
    %s153 = sphi 0, %s137
  $region4: #{scse_block.1} parent=0 // loop_header_branch
    %16 = sbr.rel (%p14) target = $region8
  $region5: #{scse_block.1} parent=0 // loop_body
    %s18 = ssub.s32 %s13, 1
    %s19 = ssub.s32 %s13, 2
    %s20 = sadd.s32 %s13, 1
    %s21 = ssub.s32 %s13, %s20
    %p22 = scmp.eq.s32.totalorder %s21, 0
    %s24 = sadd.s32 %s23, 1
    %s25 = scalar_select %p22, %s23, %s24
    %p28 = pneg %p22
    %p29 = scmp.eq.s32.totalorder %s13, 1
    %p30 = por %p28, %p29
    %p31 = scmp.ne.s32.totalorder %s23, %s26
    %p32 = scmp.eq.s32.totalorder %s13, 0
    %p33 = por %p31, %p32
    %p34 = scmp.ne.s32.totalorder %s23, %s26
    %p35 = scmp.eq.s32.totalorder %s18, 1
    %p36 = por %p34, %p35
    %p37 = scmp.ne.s32.totalorder %s26, %s27
    %p38 = scmp.eq.s32.totalorder %s18, 0
    %p39 = por %p37, %p38
    %p40 = scmp.ne.s32.totalorder %s26, %s27
    %p41 = scmp.eq.s32.totalorder %s19, 1
    %p42 = por %p40, %p41
    %p44 = scmp.ne.s32.totalorder %s27, %s43
    %p45 = scmp.eq.s32.totalorder %s19, 0
    %p46 = por %p44, %p45
    %s48 = sadd.s32 %s47, 1
    %p51 = scmp.eq.s32.totalorder %s13, 1
    %p52 = scmp.ne.s32.totalorder %s47, %s49
    %p53 = scmp.eq.s32.totalorder %s13, 0
    %p54 = por %p52, %p53
    %p55 = scmp.ne.s32.totalorder %s47, %s49
    %p56 = scmp.eq.s32.totalorder %s18, 1
    %p57 = por %p55, %p56
    %p58 = scmp.ne.s32.totalorder %s49, %s50
    %p59 = scmp.eq.s32.totalorder %s18, 0
    %p60 = por %p58, %p59
    %p61 = scmp.ne.s32.totalorder %s49, %s50
    %p62 = scmp.eq.s32.totalorder %s19, 1
    %p63 = por %p61, %p62
    %p65 = scmp.ne.s32.totalorder %s50, %s64
    %p66 = scmp.eq.s32.totalorder %s19, 0
    %p67 = por %p65, %p66
    %s69 = sadd.s32 %s68, 1
    %p72 = scmp.eq.s32.totalorder %s13, 1
    %p73 = scmp.ne.s32.totalorder %s68, %s70
    %p74 = scmp.eq.s32.totalorder %s13, 0
    %p75 = por %p73, %p74
    %p76 = scmp.ne.s32.totalorder %s68, %s70
    %p77 = scmp.eq.s32.totalorder %s18, 1
    %p78 = por %p76, %p77
    %p79 = scmp.ne.s32.totalorder %s70, %s71
    %p80 = scmp.eq.s32.totalorder %s18, 0
    %p81 = por %p79, %p80
    %p82 = scmp.ne.s32.totalorder %s70, %s71
    %p83 = scmp.eq.s32.totalorder %s19, 1
    %p84 = por %p82, %p83
    %p86 = scmp.ne.s32.totalorder %s71, %s85
    %p87 = scmp.eq.s32.totalorder %s19, 0
    %p88 = por %p86, %p87
    %s90 = sadd.s32 %s89, 1
    %p93 = scmp.eq.s32.totalorder %s13, 1
    %p94 = scmp.ne.s32.totalorder %s89, %s91
    %p95 = scmp.eq.s32.totalorder %s13, 0
    %p96 = por %p94, %p95
    %p97 = scmp.ne.s32.totalorder %s89, %s91
    %p98 = scmp.eq.s32.totalorder %s18, 1
    %p99 = por %p97, %p98
    %p100 = scmp.ne.s32.totalorder %s91, %s92
    %p101 = scmp.eq.s32.totalorder %s18, 0
    %p102 = por %p100, %p101
    %p103 = scmp.ne.s32.totalorder %s91, %s92
    %p104 = scmp.eq.s32.totalorder %s19, 1
    %p105 = por %p103, %p104
    %p107 = scmp.ne.s32.totalorder %s92, %s106
    %p108 = scmp.eq.s32.totalorder %s19, 0
    %p109 = por %p107, %p108
    %s111 = sadd.s32 %s110, 1
    %p114 = scmp.eq.s32.totalorder %s13, 1
    %p115 = scmp.ne.s32.totalorder %s110, %s112
    %p116 = scmp.eq.s32.totalorder %s13, 0
    %p117 = por %p115, %p116
    %p118 = scmp.ne.s32.totalorder %s110, %s112
    %p119 = scmp.eq.s32.totalorder %s18, 1
    %p120 = por %p118, %p119
    %p121 = scmp.ne.s32.totalorder %s112, %s113
    %p122 = scmp.eq.s32.totalorder %s18, 0
    %p123 = por %p121, %p122
    %p124 = scmp.ne.s32.totalorder %s112, %s113
    %p125 = scmp.eq.s32.totalorder %s19, 1
    %p126 = por %p124, %p125
    %p128 = scmp.ne.s32.totalorder %s113, %s127
    %p129 = scmp.eq.s32.totalorder %s19, 0
    %p130 = por %p128, %p129
    %s131 = ssub.s32 %s13, %s20
    %p132 = scmp.eq.s32.totalorder %s131, 0
    %s134 = sadd.s32 %s133, 1
    %s135 = scalar_select %p132, %s133, %s134
    %p138 = pneg %p132
    %p139 = scmp.eq.s32.totalorder %s13, 1
    %p140 = por %p138, %p139
    %p141 = scmp.ne.s32.totalorder %s133, %s136
    %p142 = scmp.eq.s32.totalorder %s13, 0
    %p143 = por %p141, %p142
    %p144 = scmp.ne.s32.totalorder %s133, %s136
    %p145 = scmp.eq.s32.totalorder %s18, 1
    %p146 = por %p144, %p145
    %p147 = scmp.ne.s32.totalorder %s136, %s137
    %p148 = scmp.eq.s32.totalorder %s18, 0
    %p149 = por %p147, %p148
    %p150 = scmp.ne.s32.totalorder %s136, %s137
    %p151 = scmp.eq.s32.totalorder %s19, 1
    %p152 = por %p150, %p151
    %p154 = scmp.ne.s32.totalorder %s137, %s153
    %p155 = scmp.eq.s32.totalorder %s19, 0
    %p156 = por %p154, %p155
    %p157 = scmp.le.s32.totalorder 1, %s13
    %p158 = scmp.lt.s32.totalorder %s13, 3
    %p159 = pnand %p157, %p158
    %p160 = pneg %p159
    // Predicated region
    $region9: #{scse_block.1} parent=5 // pred_check
      _
    $region10: #{scse_block.1} parent=5 // pred_check_branch
      %162 = sbr.rel (%p159) target = $region12
    $region11: #{scse_block.1} parent=5 // pred_region
      %s163 = ssub.s32 %s13, 1
      // Predicated region
      $region13: #{scse_block.1} parent=11 // pred_check
        %p164 = pneg %p60
      $region14: #{scse_block.1} parent=11 // pred_check_branch
        %166 = sbr.rel (%p164) target = $region16
      $region15: #{scse_block.1} parent=11 // pred_region
        _
      $region16: #{scse_block.1} parent=11 // pred_fallthru
        _
      // Predicated region
      $region17: #{scse_block.1} parent=11 // pred_check
        %p167 = pneg %p81
      $region18: #{scse_block.1} parent=11 // pred_check_branch
        %169 = sbr.rel (%p167) target = $region20
      $region19: #{scse_block.1} parent=11 // pred_region
        _
      $region20: #{scse_block.1} parent=11 // pred_fallthru
        _
      // Predicated region
      $region21: #{scse_block.1} parent=11 // pred_check
        %p170 = pneg %p102
      $region22: #{scse_block.1} parent=11 // pred_check_branch
        %172 = sbr.rel (%p170) target = $region24
      $region23: #{scse_block.1} parent=11 // pred_region
        _
      $region24: #{scse_block.1} parent=11 // pred_fallthru
        _
      // Predicated region
      $region25: #{scse_block.1} parent=11 // pred_check
        %p173 = pneg %p123
      $region26: #{scse_block.1} parent=11 // pred_check_branch
        %175 = sbr.rel (%p173) target = $region28
      $region27: #{scse_block.1} parent=11 // pred_region
        _
      $region28: #{scse_block.1} parent=11 // pred_fallthru
        _
    $region12: #{scse_block.1} parent=5 // pred_fallthru
      _
    %p176 = scmp.lt.s32.totalorder %s13, 2
    // Predicated region
    $region29: #{scse_block.1} parent=5 // pred_check
      %p177 = pneg %p176
    $region30: #{scse_block.1} parent=5 // pred_check_branch
      %179 = sbr.rel (%p177) target = $region32
    $region31: #{scse_block.1} parent=5 // pred_region
      // Predicated region
      $region33: #{scse_block.1} parent=31 // pred_check
        %p180 = pneg %p33
      $region34: #{scse_block.1} parent=31 // pred_check_branch
        %182 = sbr.rel (%p180) target = $region36
      $region35: #{scse_block.1} parent=31 // pred_region
        %p183 = scmp.lt.s32.totalorder %s13, 1
        %s184 = scalar_select %p183, %s13, 1
        %s185 = smul.addr %s184, 32
        %s186 = smul.addr %s185, 8
        %s187 = scalar_lea.vmem %s0, %s186
      $region36: #{scse_block.1} parent=31 // pred_fallthru
        _
    $region32: #{scse_block.1} parent=5 // pred_fallthru
      _
    %p188 = scmp.le.s32.totalorder 1, %s13
    %p189 = scmp.lt.s32.totalorder %s13, 3
    %p190 = pnand %p188, %p189
    %p191 = pneg %p190
    // Predicated region
    $region37: #{scse_block.1} parent=5 // pred_check
      _
    $region38: #{scse_block.1} parent=5 // pred_check_branch
      %193 = sbr.rel (%p190) target = $region40
    $region39: #{scse_block.1} parent=5 // pred_region
      %s194 = ssub.s32 %s13, 1
      %p195 = scmp.lt.s32.totalorder %s18, 1
      %s196 = scalar_select %p195, %s18, 1
      %s197 = smul.addr %s196, 32
      %s198 = smul.addr %s197, 8
      %s199 = scalar_lea.vmem %s0, %s198
      %p200 = pneg %p39
      %p201 = pneg %p36
      %p202 = pneg %p60
      %p203 = pneg %p57
      %p204 = pneg %p81
      %p205 = pneg %p78
      %p206 = pneg %p102
      %p207 = pneg %p99
      %p208 = pneg %p123
      %p209 = pneg %p120
      %p210 = pneg %p149
      %p211 = pneg %p146
      %p212 = scmp.lt.s32.totalorder %s18, 1
      %s213 = scalar_select %p212, %s18, 1
      %s214 = smul.addr %s213, 32
      %s215 = smul.addr %s214, 8
      %s216 = scalar_lea.vmem %s5, %s215
      %p217 = scmp.lt.s32.totalorder %s18, 1
      %s218 = scalar_select %p217, %s18, 1
      %s219 = smul.addr %s218, 32
      %s220 = smul.addr %s219, 8
      %s221 = scalar_lea.vmem %s0, %s220
      %p222 = scmp.lt.s32.totalorder %s18, 1
      %s223 = scalar_select %p222, %s18, 1
      %s224 = smul.addr %s223, 32
      %s225 = smul.addr %s224, 8
      %s226 = scalar_lea.vmem %s5, %s225
      %v227 = vld [vmem:[%s221] sm:$0xff]
      %v228 = vld [vmem:[%s221 + $0x8] sm:$0xff]
      %v229 = vld [vmem:[%s221 + $0x10] sm:$0xff]
      %v230 = vld [vmem:[%s221 + $0x18] sm:$0xff]
      %v231 = vld [vmem:[%s221 + $0x20] sm:$0xff]
      %v232 = vld [vmem:[%s221 + $0x28] sm:$0xff]
      %v233 = vld [vmem:[%s221 + $0x30] sm:$0xff]
      %v234 = vld [vmem:[%s221 + $0x38] sm:$0xff]
      %v235 = vld [vmem:[%s221 + $0x40] sm:$0xff]
      %v236 = vld [vmem:[%s221 + $0x48] sm:$0xff]
      %v237 = vld [vmem:[%s221 + $0x50] sm:$0xff]
      %v238 = vld [vmem:[%s221 + $0x58] sm:$0xff]
      %v239 = vld [vmem:[%s221 + $0x60] sm:$0xff]
      %v240 = vld [vmem:[%s221 + $0x68] sm:$0xff]
      %v241 = vld [vmem:[%s221 + $0x70] sm:$0xff]
      %v242 = vld [vmem:[%s221 + $0x78] sm:$0xff]
      %v243 = vld [vmem:[%s221 + $0x80] sm:$0xff]
      %v244 = vld [vmem:[%s221 + $0x88] sm:$0xff]
      %v245 = vld [vmem:[%s221 + $0x90] sm:$0xff]
      %v246 = vld [vmem:[%s221 + $0x98] sm:$0xff]
      %v247 = vld [vmem:[%s221 + $0xa0] sm:$0xff]
      %v248 = vld [vmem:[%s221 + $0xa8] sm:$0xff]
      %v249 = vld [vmem:[%s221 + $0xb0] sm:$0xff]
      %v250 = vld [vmem:[%s221 + $0xb8] sm:$0xff]
      %v251 = vld [vmem:[%s221 + $0xc0] sm:$0xff]
      %v252 = vld [vmem:[%s221 + $0xc8] sm:$0xff]
      %v253 = vld [vmem:[%s221 + $0xd0] sm:$0xff]
      %v254 = vld [vmem:[%s221 + $0xd8] sm:$0xff]
      %v255 = vld [vmem:[%s221 + $0xe0] sm:$0xff]
      %v256 = vld [vmem:[%s221 + $0xe8] sm:$0xff]
      %v257 = vld [vmem:[%s221 + $0xf0] sm:$0xff]
      %v258 = vld [vmem:[%s221 + $0xf8] sm:$0xff]
      %vm259 = vcmask 64512
      %v260 = vsel %vm259, %v227, 0.0
      %v261 = vsel %vm259, %v228, 0.0
      %v262 = vadd.f32 %v260, %v261
      %v263 = vsel %vm259, %v229, 0.0
      %v264 = vadd.f32 %v262, %v263
      %v265 = vsel %vm259, %v230, 0.0
      %v266 = vadd.f32 %v264, %v265
      %v267 = vsel %vm259, %v231, 0.0
      %v268 = vadd.f32 %v266, %v267
      %v269 = vsel %vm259, %v232, 0.0
      %v270 = vadd.f32 %v268, %v269
      %v271 = vsel %vm259, %v233, 0.0
      %v272 = vadd.f32 %v270, %v271
      %v273 = vsel %vm259, %v234, 0.0
      %v274 = vadd.f32 %v272, %v273
      %v275 = vsel %vm259, %v235, 0.0
      %v276 = vadd.f32 %v274, %v275
      %v277 = vsel %vm259, %v236, 0.0
      %v278 = vadd.f32 %v276, %v277
      %v279 = vsel %vm259, %v237, 0.0
      %v280 = vadd.f32 %v278, %v279
      %v281 = vsel %vm259, %v238, 0.0
      %v282 = vadd.f32 %v280, %v281
      %v283 = vsel %vm259, %v239, 0.0
      %v284 = vadd.f32 %v282, %v283
      %v285 = vsel %vm259, %v240, 0.0
      %v286 = vadd.f32 %v284, %v285
      %v287 = vsel %vm259, %v241, 0.0
      %v288 = vadd.f32 %v286, %v287
      %v289 = vsel %vm259, %v242, 0.0
      %v290 = vadd.f32 %v288, %v289
      %v291 = vsel %vm259, %v243, 0.0
      %v292 = vadd.f32 %v290, %v291
      %v293 = vsel %vm259, %v244, 0.0
      %v294 = vadd.f32 %v292, %v293
      %v295 = vsel %vm259, %v245, 0.0
      %v296 = vadd.f32 %v294, %v295
      %v297 = vsel %vm259, %v246, 0.0
      %v298 = vadd.f32 %v296, %v297
      %v299 = vsel %vm259, %v247, 0.0
      %v300 = vadd.f32 %v298, %v299
      %v301 = vsel %vm259, %v248, 0.0
      %v302 = vadd.f32 %v300, %v301
      %v303 = vsel %vm259, %v249, 0.0
      %v304 = vadd.f32 %v302, %v303
      %v305 = vsel %vm259, %v250, 0.0
      %v306 = vadd.f32 %v304, %v305
      %v307 = vsel %vm259, %v251, 0.0
      %v308 = vadd.f32 %v306, %v307
      %v309 = vsel %vm259, %v252, 0.0
      %v310 = vadd.f32 %v308, %v309
      %v311 = vsel %vm259, %v253, 0.0
      %v312 = vadd.f32 %v310, %v311
      %v313 = vsel %vm259, %v254, 0.0
      %v314 = vadd.f32 %v312, %v313
      %v315 = vsel %vm259, %v255, 0.0
      %v316 = vadd.f32 %v314, %v315
      %v317 = vsel %vm259, %v256, 0.0
      %v318 = vadd.f32 %v316, %v317
      %v319 = vsel %vm259, %v257, 0.0
      %v320 = vadd.f32 %v318, %v319
      %v321 = vsel %vm259, %v258, 0.0
      %v322 = vadd.f32 %v320, %v321
      %v323 = vrot.slane %v322, 4
      %v324 = vadd.f32 %v322, %v323
      %v325 = vrot.slane %v324, 2
      %v326 = vadd.f32 %v324, %v325
      %v327 = vrot.slane %v326, 1
      %v328 = vadd.f32 %v326, %v327
      %v329 = vrcp.pop 256.0
      %v330 = vmul.f32 %v328, %v329
      %v331 = vld [vmem:[%s1] sm:$0xff]
      %v333 = vsel %vm259, %v330, 0
      %335 = vmatprep.subr.mxu0 0.0
      %336 = vmatpush1.msra.mxu0 %v331
      %337 = vmatprep.subr.mxu0 0.0
      %338 = vmatpush1.msra.mxu0 0.0
      %339 = vmatprep.subr.mxu0 0.0
      %340 = vmatpush1.msra.mxu0 0.0
      %341 = vmatprep.subr.mxu0 0.0
      %342 = vmatpush1.msra.mxu0 0.0
      %343 = vmatprep.subr.mxu0 0.0
      %344 = vmatpush1.msra.mxu0 0.0
      %345 = vmatprep.subr.mxu0 0.0
      %346 = vmatpush1.msra.mxu0 0.0
      %347 = vmatprep.subr.mxu0 0.0
      %348 = vmatpush1.msra.mxu0 0.0
      %349 = vmatprep.subr.mxu0 0.0
      %350 = vmatpush1.msra.mxu0 0.0
      %351 = vmatprep.subr.mxu0 0.0
      %352 = vmatpush1.msra.mxu0 0.0
      %353 = vmatprep.subr.mxu0 0.0
      %354 = vmatpush1.msra.mxu0 0.0
      %355 = vmatprep.subr.mxu0 0.0
      %356 = vmatpush1.msra.mxu0 0.0
      %357 = vmatprep.subr.mxu0 0.0
      %358 = vmatpush1.msra.mxu0 0.0
      %359 = vmatprep.subr.mxu0 0.0
      %360 = vmatpush1.msra.mxu0 0.0
      %361 = vmatprep.subr.mxu0 0.0
      %362 = vmatpush1.msra.mxu0 0.0
      %363 = vmatprep.subr.mxu0 0.0
      %364 = vmatpush1.msra.mxu0 0.0
      %365 = vmatprep.subr.mxu0 0.0
      %366 = vmatpush1.msra.mxu0 0.0
      %367 = vmatprep.subr.mxu0 0.0
      %368 = vmatpush1.msra.mxu0 0.0
      %369 = vmatprep.subr.mxu0 0.0
      %370 = vmatpush1.msra.mxu0 0.0
      %371 = vmatprep.subr.mxu0 0.0
      %372 = vmatpush1.msra.mxu0 0.0
      %373 = vmatprep.subr.mxu0 0.0
      %374 = vmatpush1.msra.mxu0 0.0
      %375 = vmatprep.subr.mxu0 0.0
      %376 = vmatpush1.msra.mxu0 0.0
      %377 = vmatprep.subr.mxu0 0.0
      %378 = vmatpush1.msra.mxu0 0.0
      %379 = vmatprep.subr.mxu0 0.0
      %380 = vmatpush1.msra.mxu0 0.0
      %381 = vmatprep.subr.mxu0 0.0
      %382 = vmatpush1.msra.mxu0 0.0
      %383 = vmatprep.subr.mxu0 0.0
      %384 = vmatpush1.msra.mxu0 0.0
      %385 = vmatprep.subr.mxu0 0.0
      %386 = vmatpush1.msra.mxu0 0.0
      %387 = vmatprep.subr.mxu0 0.0
      %388 = vmatpush1.msra.mxu0 0.0
      %389 = vmatprep.subr.mxu0 0.0
      %390 = vmatpush1.msra.mxu0 0.0
      %391 = vmatprep.subr.mxu0 0.0
      %392 = vmatpush1.msra.mxu0 0.0
      %393 = vmatprep.subr.mxu0 0.0
      %394 = vmatpush1.msra.mxu0 0.0
      %395 = vmatprep.subr.mxu0 0.0
      %396 = vmatpush1.msra.mxu0 0.0
      %397 = vmatprep.subr.mxu0 0.0
      %398 = vmatpush1.msra.mxu0 0.0
      %399 = vmatprep.mubr.f32.mxu0 0.0
      %400 = vmatmul.mubr.f32.gmra.mrb[0].mxu0 %v333
      %v401 = vpop.f32.mrb[0].mxu0
      %v402 = vadd.f32 0.0, %v401
      %v403 = vpop.f32.mrb[0].mxu0
      %404 = vdwg.mxu0
      %v405 = vmax.f32 %v402, 0.0
      %v406 = vld [vmem:[%s2] sm:$0xf]
      %vm407 = vcmask 31744
      %v409 = vsel %vm407, %v405, 0
      %vm411 = vcmask 1043456
      %v413 = vsel %vm411, %v406, 0
      %415 = vmatprep.subr.mxu0 0.0
      %416 = vmatpush1.msra.mxu0 %v413
      %417 = vmatprep.subr.mxu0 0.0
      %418 = vmatpush1.msra.mxu0 0.0
      %419 = vmatprep.subr.mxu0 0.0
      %420 = vmatpush1.msra.mxu0 0.0
      %421 = vmatprep.subr.mxu0 0.0
      %422 = vmatpush1.msra.mxu0 0.0
      %423 = vmatprep.subr.mxu0 0.0
      %424 = vmatpush1.msra.mxu0 0.0
      %425 = vmatprep.subr.mxu0 0.0
      %426 = vmatpush1.msra.mxu0 0.0
      %427 = vmatprep.subr.mxu0 0.0
      %428 = vmatpush1.msra.mxu0 0.0
      %429 = vmatprep.subr.mxu0 0.0
      %430 = vmatpush1.msra.mxu0 0.0
      %431 = vmatprep.subr.mxu0 0.0
      %432 = vmatpush1.msra.mxu0 0.0
      %433 = vmatprep.subr.mxu0 0.0
      %434 = vmatpush1.msra.mxu0 0.0
      %435 = vmatprep.subr.mxu0 0.0
      %436 = vmatpush1.msra.mxu0 0.0
      %437 = vmatprep.subr.mxu0 0.0
      %438 = vmatpush1.msra.mxu0 0.0
      %439 = vmatprep.subr.mxu0 0.0
      %440 = vmatpush1.msra.mxu0 0.0
      %441 = vmatprep.subr.mxu0 0.0
      %442 = vmatpush1.msra.mxu0 0.0
      %443 = vmatprep.subr.mxu0 0.0
      %444 = vmatpush1.msra.mxu0 0.0
      %445 = vmatprep.subr.mxu0 0.0
      %446 = vmatpush1.msra.mxu0 0.0
      %447 = vmatprep.subr.mxu0 0.0
      %448 = vmatpush1.msra.mxu0 0.0
      %449 = vmatprep.subr.mxu0 0.0
      %450 = vmatpush1.msra.mxu0 0.0
      %451 = vmatprep.subr.mxu0 0.0
      %452 = vmatpush1.msra.mxu0 0.0
      %453 = vmatprep.subr.mxu0 0.0
      %454 = vmatpush1.msra.mxu0 0.0
      %455 = vmatprep.subr.mxu0 0.0
      %456 = vmatpush1.msra.mxu0 0.0
      %457 = vmatprep.subr.mxu0 0.0
      %458 = vmatpush1.msra.mxu0 0.0
      %459 = vmatprep.subr.mxu0 0.0
      %460 = vmatpush1.msra.mxu0 0.0
      %461 = vmatprep.subr.mxu0 0.0
      %462 = vmatpush1.msra.mxu0 0.0
      %463 = vmatprep.subr.mxu0 0.0
      %464 = vmatpush1.msra.mxu0 0.0
      %465 = vmatprep.subr.mxu0 0.0
      %466 = vmatpush1.msra.mxu0 0.0
      %467 = vmatprep.subr.mxu0 0.0
      %468 = vmatpush1.msra.mxu0 0.0
      %469 = vmatprep.subr.mxu0 0.0
      %470 = vmatpush1.msra.mxu0 0.0
      %471 = vmatprep.subr.mxu0 0.0
      %472 = vmatpush1.msra.mxu0 0.0
      %473 = vmatprep.subr.mxu0 0.0
      %474 = vmatpush1.msra.mxu0 0.0
      %475 = vmatprep.subr.mxu0 0.0
      %476 = vmatpush1.msra.mxu0 0.0
      %477 = vmatprep.subr.mxu0 0.0
      %478 = vmatpush1.msra.mxu0 0.0
      %479 = vmatprep.mubr.f32.mxu0 0.0
      %480 = vmatmul.mubr.f32.gmra.mrb[0].mxu0 %v409
      %v481 = vpop.f32.mrb[0].mxu0
      %v482 = vadd.f32 0.0, %v481
      %v483 = vpop.f32.mrb[0].mxu0
      %484 = vdwg.mxu0
      %v485 = vxor.u32 %v482, 2147483648
      %v486 = vmul.f32 %v485, 1.442695
      %v487 = vpow.pop %v486
      %v488 = vadd.f32 %v487, 1.0
      %v489 = vrcp.pop %v488
      %v490 = vmul.f32 1.0, %v489
      %v491 = vld [vmem:[%s3] sm:$0xff]
      %v492 = vld [vmem:[#allocation2] sm:$0x1]
      %v494 = vlaneseq
      %v495 = vshrl.u32 %v494, 7
      %v496 = vsub.s32 0, %v495
      %v497 = vrot.slane %v492, %v496
      %v500 = vsel %vm259, %v227, 0
      %v503 = vsel %vm259, %v228, 0
      %v506 = vsel %vm259, %v229, 0
      %v509 = vsel %vm259, %v230, 0
      %v512 = vsel %vm259, %v231, 0
      %v515 = vsel %vm259, %v232, 0
      %v518 = vsel %vm259, %v233, 0
      %v521 = vsel %vm259, %v234, 0
      %v524 = vsel %vm259, %v235, 0
      %v527 = vsel %vm259, %v236, 0
      %v530 = vsel %vm259, %v237, 0
      %v533 = vsel %vm259, %v238, 0
      %v536 = vsel %vm259, %v239, 0
      %v539 = vsel %vm259, %v240, 0
      %v542 = vsel %vm259, %v241, 0
      %v545 = vsel %vm259, %v242, 0
      %v548 = vsel %vm259, %v243, 0
      %v551 = vsel %vm259, %v244, 0
      %v554 = vsel %vm259, %v245, 0
      %v557 = vsel %vm259, %v246, 0
      %v560 = vsel %vm259, %v247, 0
      %v563 = vsel %vm259, %v248, 0
      %v566 = vsel %vm259, %v249, 0
      %v569 = vsel %vm259, %v250, 0
      %v572 = vsel %vm259, %v251, 0
      %v575 = vsel %vm259, %v252, 0
      %v578 = vsel %vm259, %v253, 0
      %v581 = vsel %vm259, %v254, 0
      %v584 = vsel %vm259, %v255, 0
      %v587 = vsel %vm259, %v256, 0
      %v590 = vsel %vm259, %v257, 0
      %v593 = vsel %vm259, %v258, 0
      %595 = vmatprep.subr.mxu0 0.0
      %596 = vmatpush1.msra.mxu0 %v491
      %597 = vmatprep.subr.mxu0 0.0
      %598 = vmatpush1.msra.mxu0 0.0
      %599 = vmatprep.subr.mxu0 0.0
      %600 = vmatpush1.msra.mxu0 0.0
      %601 = vmatprep.subr.mxu0 0.0
      %602 = vmatpush1.msra.mxu0 0.0
      %603 = vmatprep.subr.mxu0 0.0
      %604 = vmatpush1.msra.mxu0 0.0
      %605 = vmatprep.subr.mxu0 0.0
      %606 = vmatpush1.msra.mxu0 0.0
      %607 = vmatprep.subr.mxu0 0.0
      %608 = vmatpush1.msra.mxu0 0.0
      %609 = vmatprep.subr.mxu0 0.0
      %610 = vmatpush1.msra.mxu0 0.0
      %611 = vmatprep.subr.mxu0 0.0
      %612 = vmatpush1.msra.mxu0 0.0
      %613 = vmatprep.subr.mxu0 0.0
      %614 = vmatpush1.msra.mxu0 0.0
      %615 = vmatprep.subr.mxu0 0.0
      %616 = vmatpush1.msra.mxu0 0.0
      %617 = vmatprep.subr.mxu0 0.0
      %618 = vmatpush1.msra.mxu0 0.0
      %619 = vmatprep.subr.mxu0 0.0
      %620 = vmatpush1.msra.mxu0 0.0
      %621 = vmatprep.subr.mxu0 0.0
      %622 = vmatpush1.msra.mxu0 0.0
      %623 = vmatprep.subr.mxu0 0.0
      %624 = vmatpush1.msra.mxu0 0.0
      %625 = vmatprep.subr.mxu0 0.0
      %626 = vmatpush1.msra.mxu0 0.0
      %627 = vmatprep.subr.mxu0 0.0
      %628 = vmatpush1.msra.mxu0 0.0
      %629 = vmatprep.subr.mxu0 0.0
      %630 = vmatpush1.msra.mxu0 0.0
      %631 = vmatprep.subr.mxu0 0.0
      %632 = vmatpush1.msra.mxu0 0.0
      %633 = vmatprep.subr.mxu0 0.0
      %634 = vmatpush1.msra.mxu0 0.0
      %635 = vmatprep.subr.mxu0 0.0
      %636 = vmatpush1.msra.mxu0 0.0
      %637 = vmatprep.subr.mxu0 0.0
      %638 = vmatpush1.msra.mxu0 0.0
      %639 = vmatprep.subr.mxu0 0.0
      %640 = vmatpush1.msra.mxu0 0.0
      %641 = vmatprep.subr.mxu0 0.0
      %642 = vmatpush1.msra.mxu0 0.0
      %643 = vmatprep.subr.mxu0 0.0
      %644 = vmatpush1.msra.mxu0 0.0
      %645 = vmatprep.subr.mxu0 0.0
      %646 = vmatpush1.msra.mxu0 0.0
      %647 = vmatprep.subr.mxu0 0.0
      %648 = vmatpush1.msra.mxu0 0.0
      %649 = vmatprep.subr.mxu0 0.0
      %650 = vmatpush1.msra.mxu0 0.0
      %651 = vmatprep.subr.mxu0 0.0
      %652 = vmatpush1.msra.mxu0 0.0
      %653 = vmatprep.subr.mxu0 0.0
      %654 = vmatpush1.msra.mxu0 0.0
      %655 = vmatprep.subr.mxu0 0.0
      %656 = vmatpush1.msra.mxu0 0.0
      %657 = vmatprep.subr.mxu0 0.0
      %658 = vmatpush1.msra.mxu0 0.0
      %659 = vmatprep.mubr.f32.mxu0 0.0
      %660 = vmatmul.mubr.f32.gmra.mrb[0].mxu0 %v500
      %v661 = vpop.f32.mrb[0].mxu0
      %v662 = vadd.f32 %v497, %v661
      %v663 = vpop.f32.mrb[0].mxu0
      %664 = vmatprep.mubr.f32.mxu0 0.0
      %665 = vmatmul.mubr.f32.gmra.mrb[0].mxu0 %v503
      %v666 = vpop.f32.mrb[0].mxu0
      %v667 = vadd.f32 %v497, %v666
      %v668 = vpop.f32.mrb[0].mxu0
      %669 = vmatprep.mubr.f32.mxu0 0.0
      %670 = vmatmul.mubr.f32.gmra.mrb[0].mxu0 %v506
      %v671 = vpop.f32.mrb[0].mxu0
      %v672 = vadd.f32 %v497, %v671
      %v673 = vpop.f32.mrb[0].mxu0
      %674 = vmatprep.mubr.f32.mxu0 0.0
      %675 = vmatmul.mubr.f32.gmra.mrb[0].mxu0 %v509
      %v676 = vpop.f32.mrb[0].mxu0
      %v677 = vadd.f32 %v497, %v676
      %v678 = vpop.f32.mrb[0].mxu0
      %679 = vmatprep.mubr.f32.mxu0 0.0
      %680 = vmatmul.mubr.f32.gmra.mrb[0].mxu0 %v512
      %v681 = vpop.f32.mrb[0].mxu0
      %v682 = vadd.f32 %v497, %v681
      %v683 = vpop.f32.mrb[0].mxu0
      %684 = vmatprep.mubr.f32.mxu0 0.0
      %685 = vmatmul.mubr.f32.gmra.mrb[0].mxu0 %v515
      %v686 = vpop.f32.mrb[0].mxu0
      %v687 = vadd.f32 %v497, %v686
      %v688 = vpop.f32.mrb[0].mxu0
      %689 = vmatprep.mubr.f32.mxu0 0.0
      %690 = vmatmul.mubr.f32.gmra.mrb[0].mxu0 %v518
      %v691 = vpop.f32.mrb[0].mxu0
      %v692 = vadd.f32 %v497, %v691
      %v693 = vpop.f32.mrb[0].mxu0
      %694 = vmatprep.mubr.f32.mxu0 0.0
      %695 = vmatmul.mubr.f32.gmra.mrb[0].mxu0 %v521
      %v696 = vpop.f32.mrb[0].mxu0
      %v697 = vadd.f32 %v497, %v696
      %v698 = vpop.f32.mrb[0].mxu0
      %699 = vmatprep.mubr.f32.mxu0 0.0
      %700 = vmatmul.mubr.f32.gmra.mrb[0].mxu0 %v524
      %v701 = vpop.f32.mrb[0].mxu0
      %v702 = vadd.f32 %v497, %v701
      %v703 = vpop.f32.mrb[0].mxu0
      %704 = vmatprep.mubr.f32.mxu0 0.0
      %705 = vmatmul.mubr.f32.gmra.mrb[0].mxu0 %v527
      %v706 = vpop.f32.mrb[0].mxu0
      %v707 = vadd.f32 %v497, %v706
      %v708 = vpop.f32.mrb[0].mxu0
      %709 = vmatprep.mubr.f32.mxu0 0.0
      %710 = vmatmul.mubr.f32.gmra.mrb[0].mxu0 %v530
      %v711 = vpop.f32.mrb[0].mxu0
      %v712 = vadd.f32 %v497, %v711
      %v713 = vpop.f32.mrb[0].mxu0
      %714 = vmatprep.mubr.f32.mxu0 0.0
      %715 = vmatmul.mubr.f32.gmra.mrb[0].mxu0 %v533
      %v716 = vpop.f32.mrb[0].mxu0
      %v717 = vadd.f32 %v497, %v716
      %v718 = vpop.f32.mrb[0].mxu0
      %719 = vmatprep.mubr.f32.mxu0 0.0
      %720 = vmatmul.mubr.f32.gmra.mrb[0].mxu0 %v536
      %v721 = vpop.f32.mrb[0].mxu0
      %v722 = vadd.f32 %v497, %v721
      %v723 = vpop.f32.mrb[0].mxu0
      %724 = vmatprep.mubr.f32.mxu0 0.0
      %725 = vmatmul.mubr.f32.gmra.mrb[0].mxu0 %v539
      %v726 = vpop.f32.mrb[0].mxu0
      %v727 = vadd.f32 %v497, %v726
      %v728 = vpop.f32.mrb[0].mxu0
      %729 = vmatprep.mubr.f32.mxu0 0.0
      %730 = vmatmul.mubr.f32.gmra.mrb[0].mxu0 %v542
      %v731 = vpop.f32.mrb[0].mxu0
      %v732 = vadd.f32 %v497, %v731
      %v733 = vpop.f32.mrb[0].mxu0
      %734 = vmatprep.mubr.f32.mxu0 0.0
      %735 = vmatmul.mubr.f32.gmra.mrb[0].mxu0 %v545
      %v736 = vpop.f32.mrb[0].mxu0
      %v737 = vadd.f32 %v497, %v736
      %v738 = vpop.f32.mrb[0].mxu0
      %739 = vmatprep.mubr.f32.mxu0 0.0
      %740 = vmatmul.mubr.f32.gmra.mrb[0].mxu0 %v548
      %v741 = vpop.f32.mrb[0].mxu0
      %v742 = vadd.f32 %v497, %v741
      %v743 = vpop.f32.mrb[0].mxu0
      %744 = vmatprep.mubr.f32.mxu0 0.0
      %745 = vmatmul.mubr.f32.gmra.mrb[0].mxu0 %v551
      %v746 = vpop.f32.mrb[0].mxu0
      %v747 = vadd.f32 %v497, %v746
      %v748 = vpop.f32.mrb[0].mxu0
      %749 = vmatprep.mubr.f32.mxu0 0.0
      %750 = vmatmul.mubr.f32.gmra.mrb[0].mxu0 %v554
      %v751 = vpop.f32.mrb[0].mxu0
      %v752 = vadd.f32 %v497, %v751
      %v753 = vpop.f32.mrb[0].mxu0
      %754 = vmatprep.mubr.f32.mxu0 0.0
      %755 = vmatmul.mubr.f32.gmra.mrb[0].mxu0 %v557
      %v756 = vpop.f32.mrb[0].mxu0
      %v757 = vadd.f32 %v497, %v756
      %v758 = vpop.f32.mrb[0].mxu0
      %759 = vmatprep.mubr.f32.mxu0 0.0
      %760 = vmatmul.mubr.f32.gmra.mrb[0].mxu0 %v560
      %v761 = vpop.f32.mrb[0].mxu0
      %v762 = vadd.f32 %v497, %v761
      %v763 = vpop.f32.mrb[0].mxu0
      %764 = vmatprep.mubr.f32.mxu0 0.0
      %765 = vmatmul.mubr.f32.gmra.mrb[0].mxu0 %v563
      %v766 = vpop.f32.mrb[0].mxu0
      %v767 = vadd.f32 %v497, %v766
      %v768 = vpop.f32.mrb[0].mxu0
      %769 = vmatprep.mubr.f32.mxu0 0.0
      %770 = vmatmul.mubr.f32.gmra.mrb[0].mxu0 %v566
      %v771 = vpop.f32.mrb[0].mxu0
      %v772 = vadd.f32 %v497, %v771
      %v773 = vpop.f32.mrb[0].mxu0
      %774 = vmatprep.mubr.f32.mxu0 0.0
      %775 = vmatmul.mubr.f32.gmra.mrb[0].mxu0 %v569
      %v776 = vpop.f32.mrb[0].mxu0
      %v777 = vadd.f32 %v497, %v776
      %v778 = vpop.f32.mrb[0].mxu0
      %779 = vmatprep.mubr.f32.mxu0 0.0
      %780 = vmatmul.mubr.f32.gmra.mrb[0].mxu0 %v572
      %v781 = vpop.f32.mrb[0].mxu0
      %v782 = vadd.f32 %v497, %v781
      %v783 = vpop.f32.mrb[0].mxu0
      %784 = vmatprep.mubr.f32.mxu0 0.0
      %785 = vmatmul.mubr.f32.gmra.mrb[0].mxu0 %v575
      %v786 = vpop.f32.mrb[0].mxu0
      %v787 = vadd.f32 %v497, %v786
      %v788 = vpop.f32.mrb[0].mxu0
      %789 = vmatprep.mubr.f32.mxu0 0.0
      %790 = vmatmul.mubr.f32.gmra.mrb[0].mxu0 %v578
      %v791 = vpop.f32.mrb[0].mxu0
      %v792 = vadd.f32 %v497, %v791
      %v793 = vpop.f32.mrb[0].mxu0
      %794 = vmatprep.mubr.f32.mxu0 0.0
      %795 = vmatmul.mubr.f32.gmra.mrb[0].mxu0 %v581
      %v796 = vpop.f32.mrb[0].mxu0
      %v797 = vadd.f32 %v497, %v796
      %v798 = vpop.f32.mrb[0].mxu0
      %799 = vmatprep.mubr.f32.mxu0 0.0
      %800 = vmatmul.mubr.f32.gmra.mrb[0].mxu0 %v584
      %v801 = vpop.f32.mrb[0].mxu0
      %v802 = vadd.f32 %v497, %v801
      %v803 = vpop.f32.mrb[0].mxu0
      %804 = vmatprep.mubr.f32.mxu0 0.0
      %805 = vmatmul.mubr.f32.gmra.mrb[0].mxu0 %v587
      %v806 = vpop.f32.mrb[0].mxu0
      %v807 = vadd.f32 %v497, %v806
      %v808 = vpop.f32.mrb[0].mxu0
      %809 = vmatprep.mubr.f32.mxu0 0.0
      %810 = vmatmul.mubr.f32.gmra.mrb[0].mxu0 %v590
      %v811 = vpop.f32.mrb[0].mxu0
      %v812 = vadd.f32 %v497, %v811
      %v813 = vpop.f32.mrb[0].mxu0
      %814 = vmatprep.mubr.f32.mxu0 0.0
      %815 = vmatmul.mubr.f32.gmra.mrb[0].mxu0 %v593
      %v816 = vpop.f32.mrb[0].mxu0
      %v817 = vadd.f32 %v497, %v816
      %v818 = vpop.f32.mrb[0].mxu0
      %819 = vdwg.mxu0
      %v820 = vxor.u32 %v662, 2147483648
      %v821 = vxor.u32 %v667, 2147483648
      %v822 = vxor.u32 %v672, 2147483648
      %v823 = vxor.u32 %v677, 2147483648
      %v824 = vxor.u32 %v682, 2147483648
      %v825 = vxor.u32 %v687, 2147483648
      %v826 = vxor.u32 %v692, 2147483648
      %v827 = vxor.u32 %v697, 2147483648
      %v828 = vxor.u32 %v702, 2147483648
      %v829 = vxor.u32 %v707, 2147483648
      %v830 = vxor.u32 %v712, 2147483648
      %v831 = vxor.u32 %v717, 2147483648
      %v832 = vxor.u32 %v722, 2147483648
      %v833 = vxor.u32 %v727, 2147483648
      %v834 = vxor.u32 %v732, 2147483648
      %v835 = vxor.u32 %v737, 2147483648
      %v836 = vxor.u32 %v742, 2147483648
      %v837 = vxor.u32 %v747, 2147483648
      %v838 = vxor.u32 %v752, 2147483648
      %v839 = vxor.u32 %v757, 2147483648
      %v840 = vxor.u32 %v762, 2147483648
      %v841 = vxor.u32 %v767, 2147483648
      %v842 = vxor.u32 %v772, 2147483648
      %v843 = vxor.u32 %v777, 2147483648
      %v844 = vxor.u32 %v782, 2147483648
      %v845 = vxor.u32 %v787, 2147483648
      %v846 = vxor.u32 %v792, 2147483648
      %v847 = vxor.u32 %v797, 2147483648
      %v848 = vxor.u32 %v802, 2147483648
      %v849 = vxor.u32 %v807, 2147483648
      %v850 = vxor.u32 %v812, 2147483648
      %v851 = vxor.u32 %v817, 2147483648
      %v852 = vmul.f32 %v820, 1.442695
      %v853 = vpow.pop %v852
      %v854 = vmul.f32 %v821, 1.442695
      %v855 = vpow.pop %v854
      %v856 = vmul.f32 %v822, 1.442695
      %v857 = vpow.pop %v856
      %v858 = vmul.f32 %v823, 1.442695
      %v859 = vpow.pop %v858
      %v860 = vmul.f32 %v824, 1.442695
      %v861 = vpow.pop %v860
      %v862 = vmul.f32 %v825, 1.442695
      %v863 = vpow.pop %v862
      %v864 = vmul.f32 %v826, 1.442695
      %v865 = vpow.pop %v864
      %v866 = vmul.f32 %v827, 1.442695
      %v867 = vpow.pop %v866
      %v868 = vmul.f32 %v828, 1.442695
      %v869 = vpow.pop %v868
      %v870 = vmul.f32 %v829, 1.442695
      %v871 = vpow.pop %v870
      %v872 = vmul.f32 %v830, 1.442695
      %v873 = vpow.pop %v872
      %v874 = vmul.f32 %v831, 1.442695
      %v875 = vpow.pop %v874
      %v876 = vmul.f32 %v832, 1.442695
      %v877 = vpow.pop %v876
      %v878 = vmul.f32 %v833, 1.442695
      %v879 = vpow.pop %v878
      %v880 = vmul.f32 %v834, 1.442695
      %v881 = vpow.pop %v880
      %v882 = vmul.f32 %v835, 1.442695
      %v883 = vpow.pop %v882
      %v884 = vmul.f32 %v836, 1.442695
      %v885 = vpow.pop %v884
      %v886 = vmul.f32 %v837, 1.442695
      %v887 = vpow.pop %v886
      %v888 = vmul.f32 %v838, 1.442695
      %v889 = vpow.pop %v888
      %v890 = vmul.f32 %v839, 1.442695
      %v891 = vpow.pop %v890
      %v892 = vmul.f32 %v840, 1.442695
      %v893 = vpow.pop %v892
      %v894 = vmul.f32 %v841, 1.442695
      %v895 = vpow.pop %v894
      %v896 = vmul.f32 %v842, 1.442695
      %v897 = vpow.pop %v896
      %v898 = vmul.f32 %v843, 1.442695
      %v899 = vpow.pop %v898
      %v900 = vmul.f32 %v844, 1.442695
      %v901 = vpow.pop %v900
      %v902 = vmul.f32 %v845, 1.442695
      %v903 = vpow.pop %v902
      %v904 = vmul.f32 %v846, 1.442695
      %v905 = vpow.pop %v904
      %v906 = vmul.f32 %v847, 1.442695
      %v907 = vpow.pop %v906
      %v908 = vmul.f32 %v848, 1.442695
      %v909 = vpow.pop %v908
      %v910 = vmul.f32 %v849, 1.442695
      %v911 = vpow.pop %v910
      %v912 = vmul.f32 %v850, 1.442695
      %v913 = vpow.pop %v912
      %v914 = vmul.f32 %v851, 1.442695
      %v915 = vpow.pop %v914
      %v916 = vadd.f32 %v853, 1.0
      %v917 = vadd.f32 %v855, 1.0
      %v918 = vadd.f32 %v857, 1.0
      %v919 = vadd.f32 %v859, 1.0
      %v920 = vadd.f32 %v861, 1.0
      %v921 = vadd.f32 %v863, 1.0
      %v922 = vadd.f32 %v865, 1.0
      %v923 = vadd.f32 %v867, 1.0
      %v924 = vadd.f32 %v869, 1.0
      %v925 = vadd.f32 %v871, 1.0
      %v926 = vadd.f32 %v873, 1.0
      %v927 = vadd.f32 %v875, 1.0
      %v928 = vadd.f32 %v877, 1.0
      %v929 = vadd.f32 %v879, 1.0
      %v930 = vadd.f32 %v881, 1.0
      %v931 = vadd.f32 %v883, 1.0
      %v932 = vadd.f32 %v885, 1.0
      %v933 = vadd.f32 %v887, 1.0
      %v934 = vadd.f32 %v889, 1.0
      %v935 = vadd.f32 %v891, 1.0
      %v936 = vadd.f32 %v893, 1.0
      %v937 = vadd.f32 %v895, 1.0
      %v938 = vadd.f32 %v897, 1.0
      %v939 = vadd.f32 %v899, 1.0
      %v940 = vadd.f32 %v901, 1.0
      %v941 = vadd.f32 %v903, 1.0
      %v942 = vadd.f32 %v905, 1.0
      %v943 = vadd.f32 %v907, 1.0
      %v944 = vadd.f32 %v909, 1.0
      %v945 = vadd.f32 %v911, 1.0
      %v946 = vadd.f32 %v913, 1.0
      %v947 = vadd.f32 %v915, 1.0
      %v948 = vrcp.pop %v916
      %v949 = vmul.f32 1.0, %v948
      %v950 = vrcp.pop %v917
      %v951 = vmul.f32 1.0, %v950
      %v952 = vrcp.pop %v918
      %v953 = vmul.f32 1.0, %v952
      %v954 = vrcp.pop %v919
      %v955 = vmul.f32 1.0, %v954
      %v956 = vrcp.pop %v920
      %v957 = vmul.f32 1.0, %v956
      %v958 = vrcp.pop %v921
      %v959 = vmul.f32 1.0, %v958
      %v960 = vrcp.pop %v922
      %v961 = vmul.f32 1.0, %v960
      %v962 = vrcp.pop %v923
      %v963 = vmul.f32 1.0, %v962
      %v964 = vrcp.pop %v924
      %v965 = vmul.f32 1.0, %v964
      %v966 = vrcp.pop %v925
      %v967 = vmul.f32 1.0, %v966
      %v968 = vrcp.pop %v926
      %v969 = vmul.f32 1.0, %v968
      %v970 = vrcp.pop %v927
      %v971 = vmul.f32 1.0, %v970
      %v972 = vrcp.pop %v928
      %v973 = vmul.f32 1.0, %v972
      %v974 = vrcp.pop %v929
      %v975 = vmul.f32 1.0, %v974
      %v976 = vrcp.pop %v930
      %v977 = vmul.f32 1.0, %v976
      %v978 = vrcp.pop %v931
      %v979 = vmul.f32 1.0, %v978
      %v980 = vrcp.pop %v932
      %v981 = vmul.f32 1.0, %v980
      %v982 = vrcp.pop %v933
      %v983 = vmul.f32 1.0, %v982
      %v984 = vrcp.pop %v934
      %v985 = vmul.f32 1.0, %v984
      %v986 = vrcp.pop %v935
      %v987 = vmul.f32 1.0, %v986
      %v988 = vrcp.pop %v936
      %v989 = vmul.f32 1.0, %v988
      %v990 = vrcp.pop %v937
      %v991 = vmul.f32 1.0, %v990
      %v992 = vrcp.pop %v938
      %v993 = vmul.f32 1.0, %v992
      %v994 = vrcp.pop %v939
      %v995 = vmul.f32 1.0, %v994
      %v996 = vrcp.pop %v940
      %v997 = vmul.f32 1.0, %v996
      %v998 = vrcp.pop %v941
      %v999 = vmul.f32 1.0, %v998
      %v1000 = vrcp.pop %v942
      %v1001 = vmul.f32 1.0, %v1000
      %v1002 = vrcp.pop %v943
      %v1003 = vmul.f32 1.0, %v1002
      %v1004 = vrcp.pop %v944
      %v1005 = vmul.f32 1.0, %v1004
      %v1006 = vrcp.pop %v945
      %v1007 = vmul.f32 1.0, %v1006
      %v1008 = vrcp.pop %v946
      %v1009 = vmul.f32 1.0, %v1008
      %v1010 = vrcp.pop %v947
      %v1011 = vmul.f32 1.0, %v1010
      %v1012 = vlaneseq
      %v1013 = vshrl.u32 %v1012, 7
      %v1014 = vsub.s32 0, %v1013
      %v1015 = vrot.slane %v490, %v1014
      %1017 = vset.pattern.permute.xlu0 0
      %1018 = vperm.xlu0 %1017, %v949
      %v1019 = vpop.permute.xlu0 %1018
      %1022 = vset.pattern.permute.xlu0 0
      %1023 = vperm.xlu0 %1022, %v951
      %v1024 = vpop.permute.xlu0 %1023
      %1027 = vset.pattern.permute.xlu0 0
      %1028 = vperm.xlu0 %1027, %v953
      %v1029 = vpop.permute.xlu0 %1028
      %1032 = vset.pattern.permute.xlu0 0
      %1033 = vperm.xlu0 %1032, %v955
      %v1034 = vpop.permute.xlu0 %1033
      %1037 = vset.pattern.permute.xlu0 0
      %1038 = vperm.xlu0 %1037, %v957
      %v1039 = vpop.permute.xlu0 %1038
      %1042 = vset.pattern.permute.xlu0 0
      %1043 = vperm.xlu0 %1042, %v959
      %v1044 = vpop.permute.xlu0 %1043
      %1047 = vset.pattern.permute.xlu0 0
      %1048 = vperm.xlu0 %1047, %v961
      %v1049 = vpop.permute.xlu0 %1048
      %1052 = vset.pattern.permute.xlu0 0
      %1053 = vperm.xlu0 %1052, %v963
      %v1054 = vpop.permute.xlu0 %1053
      %1057 = vset.pattern.permute.xlu0 0
      %1058 = vperm.xlu0 %1057, %v965
      %v1059 = vpop.permute.xlu0 %1058
      %1062 = vset.pattern.permute.xlu0 0
      %1063 = vperm.xlu0 %1062, %v967
      %v1064 = vpop.permute.xlu0 %1063
      %1067 = vset.pattern.permute.xlu0 0
      %1068 = vperm.xlu0 %1067, %v969
      %v1069 = vpop.permute.xlu0 %1068
      %1072 = vset.pattern.permute.xlu0 0
      %1073 = vperm.xlu0 %1072, %v971
      %v1074 = vpop.permute.xlu0 %1073
      %1077 = vset.pattern.permute.xlu0 0
      %1078 = vperm.xlu0 %1077, %v973
      %v1079 = vpop.permute.xlu0 %1078
      %1082 = vset.pattern.permute.xlu0 0
      %1083 = vperm.xlu0 %1082, %v975
      %v1084 = vpop.permute.xlu0 %1083
      %1087 = vset.pattern.permute.xlu0 0
      %1088 = vperm.xlu0 %1087, %v977
      %v1089 = vpop.permute.xlu0 %1088
      %1092 = vset.pattern.permute.xlu0 0
      %1093 = vperm.xlu0 %1092, %v979
      %v1094 = vpop.permute.xlu0 %1093
      %1097 = vset.pattern.permute.xlu0 0
      %1098 = vperm.xlu0 %1097, %v981
      %v1099 = vpop.permute.xlu0 %1098
      %1102 = vset.pattern.permute.xlu0 0
      %1103 = vperm.xlu0 %1102, %v983
      %v1104 = vpop.permute.xlu0 %1103
      %1107 = vset.pattern.permute.xlu0 0
      %1108 = vperm.xlu0 %1107, %v985
      %v1109 = vpop.permute.xlu0 %1108
      %1112 = vset.pattern.permute.xlu0 0
      %1113 = vperm.xlu0 %1112, %v987
      %v1114 = vpop.permute.xlu0 %1113
      %1117 = vset.pattern.permute.xlu0 0
      %1118 = vperm.xlu0 %1117, %v989
      %v1119 = vpop.permute.xlu0 %1118
      %1122 = vset.pattern.permute.xlu0 0
      %1123 = vperm.xlu0 %1122, %v991
      %v1124 = vpop.permute.xlu0 %1123
      %1127 = vset.pattern.permute.xlu0 0
      %1128 = vperm.xlu0 %1127, %v993
      %v1129 = vpop.permute.xlu0 %1128
      %1132 = vset.pattern.permute.xlu0 0
      %1133 = vperm.xlu0 %1132, %v995
      %v1134 = vpop.permute.xlu0 %1133
      %1137 = vset.pattern.permute.xlu0 0
      %1138 = vperm.xlu0 %1137, %v997
      %v1139 = vpop.permute.xlu0 %1138
      %1142 = vset.pattern.permute.xlu0 0
      %1143 = vperm.xlu0 %1142, %v999
      %v1144 = vpop.permute.xlu0 %1143
      %1147 = vset.pattern.permute.xlu0 0
      %1148 = vperm.xlu0 %1147, %v1001
      %v1149 = vpop.permute.xlu0 %1148
      %1152 = vset.pattern.permute.xlu0 0
      %1153 = vperm.xlu0 %1152, %v1003
      %v1154 = vpop.permute.xlu0 %1153
      %1157 = vset.pattern.permute.xlu0 0
      %1158 = vperm.xlu0 %1157, %v1005
      %v1159 = vpop.permute.xlu0 %1158
      %1162 = vset.pattern.permute.xlu0 0
      %1163 = vperm.xlu0 %1162, %v1007
      %v1164 = vpop.permute.xlu0 %1163
      %1167 = vset.pattern.permute.xlu0 0
      %1168 = vperm.xlu0 %1167, %v1009
      %v1169 = vpop.permute.xlu0 %1168
      %1172 = vset.pattern.permute.xlu0 0
      %1173 = vperm.xlu0 %1172, %v1011
      %v1174 = vpop.permute.xlu0 %1173
      %v1176 = vadd.f32 %v1015, %v1019
      %v1177 = vadd.f32 %v1015, %v1024
      %v1178 = vadd.f32 %v1015, %v1029
      %v1179 = vadd.f32 %v1015, %v1034
      %v1180 = vadd.f32 %v1015, %v1039
      %v1181 = vadd.f32 %v1015, %v1044
      %v1182 = vadd.f32 %v1015, %v1049
      %v1183 = vadd.f32 %v1015, %v1054
      %v1184 = vadd.f32 %v1015, %v1059
      %v1185 = vadd.f32 %v1015, %v1064
      %v1186 = vadd.f32 %v1015, %v1069
      %v1187 = vadd.f32 %v1015, %v1074
      %v1188 = vadd.f32 %v1015, %v1079
      %v1189 = vadd.f32 %v1015, %v1084
      %v1190 = vadd.f32 %v1015, %v1089
      %v1191 = vadd.f32 %v1015, %v1094
      %v1192 = vadd.f32 %v1015, %v1099
      %v1193 = vadd.f32 %v1015, %v1104
      %v1194 = vadd.f32 %v1015, %v1109
      %v1195 = vadd.f32 %v1015, %v1114
      %v1196 = vadd.f32 %v1015, %v1119
      %v1197 = vadd.f32 %v1015, %v1124
      %v1198 = vadd.f32 %v1015, %v1129
      %v1199 = vadd.f32 %v1015, %v1134
      %v1200 = vadd.f32 %v1015, %v1139
      %v1201 = vadd.f32 %v1015, %v1144
      %v1202 = vadd.f32 %v1015, %v1149
      %v1203 = vadd.f32 %v1015, %v1154
      %v1204 = vadd.f32 %v1015, %v1159
      %v1205 = vadd.f32 %v1015, %v1164
      %v1206 = vadd.f32 %v1015, %v1169
      %v1207 = vadd.f32 %v1015, %v1174
      %v1208 = vmul.f32 %v227, %v1176
      %v1209 = vmul.f32 %v228, %v1177
      %v1210 = vmul.f32 %v229, %v1178
      %v1211 = vmul.f32 %v230, %v1179
      %v1212 = vmul.f32 %v231, %v1180
      %v1213 = vmul.f32 %v232, %v1181
      %v1214 = vmul.f32 %v233, %v1182
      %v1215 = vmul.f32 %v234, %v1183
      %v1216 = vmul.f32 %v235, %v1184
      %v1217 = vmul.f32 %v236, %v1185
      %v1218 = vmul.f32 %v237, %v1186
      %v1219 = vmul.f32 %v238, %v1187
      %v1220 = vmul.f32 %v239, %v1188
      %v1221 = vmul.f32 %v240, %v1189
      %v1222 = vmul.f32 %v241, %v1190
      %v1223 = vmul.f32 %v242, %v1191
      %v1224 = vmul.f32 %v243, %v1192
      %v1225 = vmul.f32 %v244, %v1193
      %v1226 = vmul.f32 %v245, %v1194
      %v1227 = vmul.f32 %v246, %v1195
      %v1228 = vmul.f32 %v247, %v1196
      %v1229 = vmul.f32 %v248, %v1197
      %v1230 = vmul.f32 %v249, %v1198
      %v1231 = vmul.f32 %v250, %v1199
      %v1232 = vmul.f32 %v251, %v1200
      %v1233 = vmul.f32 %v252, %v1201
      %v1234 = vmul.f32 %v253, %v1202
      %v1235 = vmul.f32 %v254, %v1203
      %v1236 = vmul.f32 %v255, %v1204
      %v1237 = vmul.f32 %v256, %v1205
      %v1238 = vmul.f32 %v257, %v1206
      %v1239 = vmul.f32 %v258, %v1207
      %1240 = vst.msk [vmem:[%s226] sm:$0xff] %vm259, %v1208
      %1241 = vst.msk [vmem:[%s226 + $0x8] sm:$0xff] %vm259, %v1209
      %1242 = vst.msk [vmem:[%s226 + $0x10] sm:$0xff] %vm259, %v1210
      %1243 = vst.msk [vmem:[%s226 + $0x18] sm:$0xff] %vm259, %v1211
      %1244 = vst.msk [vmem:[%s226 + $0x20] sm:$0xff] %vm259, %v1212
      %1245 = vst.msk [vmem:[%s226 + $0x28] sm:$0xff] %vm259, %v1213
      %1246 = vst.msk [vmem:[%s226 + $0x30] sm:$0xff] %vm259, %v1214
      %1247 = vst.msk [vmem:[%s226 + $0x38] sm:$0xff] %vm259, %v1215
      %1248 = vst.msk [vmem:[%s226 + $0x40] sm:$0xff] %vm259, %v1216
      %1249 = vst.msk [vmem:[%s226 + $0x48] sm:$0xff] %vm259, %v1217
      %1250 = vst.msk [vmem:[%s226 + $0x50] sm:$0xff] %vm259, %v1218
      %1251 = vst.msk [vmem:[%s226 + $0x58] sm:$0xff] %vm259, %v1219
      %1252 = vst.msk [vmem:[%s226 + $0x60] sm:$0xff] %vm259, %v1220
      %1253 = vst.msk [vmem:[%s226 + $0x68] sm:$0xff] %vm259, %v1221
      %1254 = vst.msk [vmem:[%s226 + $0x70] sm:$0xff] %vm259, %v1222
      %1255 = vst.msk [vmem:[%s226 + $0x78] sm:$0xff] %vm259, %v1223
      %1256 = vst.msk [vmem:[%s226 + $0x80] sm:$0xff] %vm259, %v1224
      %1257 = vst.msk [vmem:[%s226 + $0x88] sm:$0xff] %vm259, %v1225
      %1258 = vst.msk [vmem:[%s226 + $0x90] sm:$0xff] %vm259, %v1226
      %1259 = vst.msk [vmem:[%s226 + $0x98] sm:$0xff] %vm259, %v1227
      %1260 = vst.msk [vmem:[%s226 + $0xa0] sm:$0xff] %vm259, %v1228
      %1261 = vst.msk [vmem:[%s226 + $0xa8] sm:$0xff] %vm259, %v1229
      %1262 = vst.msk [vmem:[%s226 + $0xb0] sm:$0xff] %vm259, %v1230
      %1263 = vst.msk [vmem:[%s226 + $0xb8] sm:$0xff] %vm259, %v1231
      %1264 = vst.msk [vmem:[%s226 + $0xc0] sm:$0xff] %vm259, %v1232
      %1265 = vst.msk [vmem:[%s226 + $0xc8] sm:$0xff] %vm259, %v1233
      %1266 = vst.msk [vmem:[%s226 + $0xd0] sm:$0xff] %vm259, %v1234
      %1267 = vst.msk [vmem:[%s226 + $0xd8] sm:$0xff] %vm259, %v1235
      %1268 = vst.msk [vmem:[%s226 + $0xe0] sm:$0xff] %vm259, %v1236
      %1269 = vst.msk [vmem:[%s226 + $0xe8] sm:$0xff] %vm259, %v1237
      %1270 = vst.msk [vmem:[%s226 + $0xf0] sm:$0xff] %vm259, %v1238
      %1271 = vst.msk [vmem:[%s226 + $0xf8] sm:$0xff] %vm259, %v1239
      %p1272 = scmp.lt.s32.totalorder %s18, 1
      %s1273 = scalar_select %p1272, %s18, 1
      %s1274 = smul.addr %s1273, 32
      %s1275 = smul.addr %s1274, 8
      %s1276 = scalar_lea.vmem %s5, %s1275
      // Predicated region
      $region41: #{scse_block.1} parent=39 // pred_check
        %p1277 = pneg %p146
      $region42: #{scse_block.1} parent=39 // pred_check_branch
        %1279 = sbr.rel (%p1277) target = $region44
      $region43: #{scse_block.1} parent=39 // pred_region
        _
      $region44: #{scse_block.1} parent=39 // pred_fallthru
        _
    $region40: #{scse_block.1} parent=5 // pred_fallthru
      _
    %p1280 = scmp.le.s32.totalorder 2, %s13
    // Predicated region
    $region45: #{scse_block.1} parent=5 // pred_check
      %p1281 = pneg %p1280
    $region46: #{scse_block.1} parent=5 // pred_check_branch
      %1283 = sbr.rel (%p1281) target = $region48
    $region47: #{scse_block.1} parent=5 // pred_region
      %s1284 = ssub.s32 %s13, 2
      // Predicated region
      $region49: #{scse_block.1} parent=47 // pred_check
        %p1285 = pneg %p152
      $region50: #{scse_block.1} parent=47 // pred_check_branch
        %1287 = sbr.rel (%p1285) target = $region52
      $region51: #{scse_block.1} parent=47 // pred_region
        %p1288 = scmp.lt.s32.totalorder %s19, 1
        %s1289 = scalar_select %p1288, %s19, 1
        %s1290 = smul.addr %s1289, 32
        %s1291 = smul.addr %s1290, 8
        %s1292 = scalar_lea.vmem %s5, %s1291
      $region52: #{scse_block.1} parent=47 // pred_fallthru
        _
    $region48: #{scse_block.1} parent=5 // pred_fallthru
      _
  $region6: #{scse_block.1} parent=0 // loop_footer
    %s17 = sadd.s32 1, %s13
  $region7: #{scse_block.1} parent=0 // loop_footer_branch
    %12 = sbr.rel target = $region3
  $region8: #{scse_block.1} parent=0 // loop_exit
    _

</llo_original>
